<compile_context>
chip_gen: v5e
topology: v5e:2x2
jax: 0.10.0
libtpu: 0.0.40
codegen_flags: <defaults>
</compile_context>

<pallas_src>
import functools

import jax
import jax.numpy as jnp
from jax.experimental import pallas as pl
from jax.experimental.pallas import tpu as pltpu


def conductor_kernel(x_ref, w1_ref, b1_ref, w2_ref, b2_ref,
                     w3_ref, b3_ref, w4_ref, b4_ref, o_ref):
    # x_ref : [8, TILE_B] bf16 (feature dim padded 7->8; batch on the 128-lane axis)
    # wN_ref: f32, PyTorch [out, in] layout (w1 padded to [16, 8]); VMEM-resident
    # bN_ref: f32 [out, 1] -> broadcasts across the lane (batch) axis
    # o_ref : [2, TILE_B] f32
    x = x_ref[...].astype(jnp.float32)

    h = jnp.dot(w1_ref[...], x, preferred_element_type=jnp.float32) + b1_ref[...]
    h = jnp.maximum(h, 0.0)
    h = jnp.dot(w2_ref[...], h, preferred_element_type=jnp.float32) + b2_ref[...]
    h = jnp.maximum(h, 0.0)
    h = jnp.dot(w3_ref[...], h, preferred_element_type=jnp.float32) + b3_ref[...]
    h = jnp.maximum(h, 0.0)
    o_ref[...] = (jnp.dot(w4_ref[...], h, preferred_element_type=jnp.float32)
                  + b4_ref[...]).astype(o_ref.dtype)


def _adaptive_tile_b(B, n_target_tiles=4, min_tile=1024, max_tile=16384):
    # Aim for ~4 tiles (keeps both v7x TCs busy), 128-lane aligned, clamped so
    # per-step overhead is amortized (>=1024) and VMEM stays comfortable (<=16K).
    t = -(-B // n_target_tiles)
    t = ((t + 127) // 128) * 128
    return int(max(min_tile, min(max_tile, t)))


def _forward_feature_major(x_f, params, tile_b):
    """x_f: [7, B] float (feature-major). Returns [2, B] f32."""
    f_in, B = x_f.shape
    assert f_in == 7
    if tile_b is None:
        tile_b = _adaptive_tile_b(B)
    n_tiles = pl.cdiv(B, tile_b)
    Bp = n_tiles * tile_b

    # Fused pad (feature 7->8, batch B->Bp) + bf16 cast: halves the dominant
    # HBM input stream; the extra feature row is zeros (matched by a zero weight
    # column below), so it has no numerical effect.
    x_t = jnp.pad(x_f, ((0, 1), (0, Bp - B))).astype(jnp.bfloat16)    # [8, Bp]

    (w1, b1), (w2, b2), (w3, b3), (w4, b4) = params
    w1p = jnp.pad(w1.astype(jnp.float32), ((0, 0), (0, 1)))           # [16, 8]
    flat = [
        w1p, b1.astype(jnp.float32).reshape(-1, 1),
        w2.astype(jnp.float32), b2.astype(jnp.float32).reshape(-1, 1),
        w3.astype(jnp.float32), b3.astype(jnp.float32).reshape(-1, 1),
        w4.astype(jnp.float32), b4.astype(jnp.float32).reshape(-1, 1),
    ]

    def const_spec(shape):
        # Whole-array block, constant index map -> DMA'd once, stays VMEM-resident.
        return pl.BlockSpec(shape, lambda i: (0, 0))

    flops_per_col = 2 * (16 * 8 + 16 * 16 + 16 * 16 + 2 * 16)
    cost = pl.CostEstimate(
        flops=flops_per_col * Bp,
        transcendentals=0,
        bytes_accessed=8 * Bp * 2 + 2 * Bp * 4
                       + sum(int(a.size) * a.dtype.itemsize for a in flat),
    )

    out_t = pl.pallas_call(
        conductor_kernel,
        out_shape=jax.ShapeDtypeStruct((2, Bp), jnp.float32),
        grid=(n_tiles,),
        in_specs=[pl.BlockSpec((8, tile_b), lambda i: (0, i))]        # streamed bf16 batch tile
                 + [const_spec(a.shape) for a in flat],               # resident params
        out_specs=pl.BlockSpec((2, tile_b), lambda i: (0, i)),        # lane-dense store
        compiler_params=pltpu.CompilerParams(
            dimension_semantics=("parallel",)),   # v7x: shard batch tiles over both TCs
        cost_estimate=cost,
    )(x_t, *flat)

    return out_t[:, :B]


@functools.partial(jax.jit, static_argnames=("tile_b",))
def conductor_net_feature_major(x_f, params, *, tile_b=None):
    """Feature-major API: x_f [7, B] -> [2, B] f32 (no transpose round trips)."""
    return _forward_feature_major(x_f, params, tile_b)


@functools.partial(jax.jit, static_argnames=("tile_b",))
def conductor_net(x, params, *, tile_b=None):
    """Batch-major API matching PyTorch: x [B, 7] -> [B, 2] f32.

    The transpose/pad/cast and the output transpose live inside this single jit
    so XLA can fuse them; callers that can supply feature-major data should use
    `conductor_net_feature_major` directly.
    """
    out_f = _forward_feature_major(jnp.transpose(x), params, tile_b)
    return jnp.transpose(out_f)


def init_linear(key, fan_in, fan_out):
    # PyTorch nn.Linear default init: U(-1/sqrt(fan_in), 1/sqrt(fan_in)); w is [out, in].
    kw, kb = jax.random.split(key)
    bound = 1.0 / jnp.sqrt(float(fan_in))
    w = jax.random.uniform(kw, (fan_out, fan_in), jnp.float32, -bound, bound)
    b = jax.random.uniform(kb, (fan_out,), jnp.float32, -bound, bound)
    return w, b


def reference_forward(x, params):
    # Pure-JAX reference in f32 (HIGHEST precision so the TPU reference matmul
    # isn't silently truncated to bf16).
    h = x
    for i, (w, b) in enumerate(params):
        h = jnp.dot(h, w.T, precision=jax.lax.Precision.HIGHEST) + b
        if i < len(params) - 1:
            h = jnp.maximum(h, 0.0)
    return h


def reference_forward_kernel_matched(x, params):
    # Matches the kernel's numerics: input quantized to bf16, everything else f32.
    return reference_forward(x.astype(jnp.bfloat16).astype(jnp.float32), params)


if __name__ == "__main__":
    key = jax.random.PRNGKey(0)
    kx, kx2, k1, k2, k3, k4 = jax.random.split(key, 6)

    params = [
        init_linear(k1, 7, 16),
        init_linear(k2, 16, 16),
        init_linear(k3, 16, 16),
        init_linear(k4, 16, 2),
    ]

    # Small shape consistent with the module.
    B = 8
    x = jax.random.normal(kx, (B, 7), dtype=jnp.float32)

    out = jax.block_until_ready(conductor_net(x, params))
    assert out.shape == (B, 2)
    assert jnp.allclose(out, reference_forward_kernel_matched(x, params),
                        atol=1e-3, rtol=1e-3), "mismatch vs kernel-matched reference (B=8)"
    assert float(jnp.max(jnp.abs(out - reference_forward(x, params)))) < 1e-1, \
        "mismatch vs pure f32 reference (B=8)"

    # Larger, non-multiple batch: exercises adaptive tiling (4 tiles), padding path.
    B2 = 4501
    x2 = jax.random.normal(kx2, (B2, 7), dtype=jnp.float32)
    out2 = jax.block_until_ready(conductor_net(x2, params))
    assert out2.shape == (B2, 2)
    assert jnp.allclose(out2, reference_forward_kernel_matched(x2, params),
                        atol=1e-3, rtol=1e-3), "mismatch vs kernel-matched reference (B=4501)"
    assert float(jnp.max(jnp.abs(out2 - reference_forward(x2, params)))) < 1e-1, \
        "mismatch vs pure f32 reference (B=4501)"

    # Feature-major entry point (no wrapper transposes) agrees with the batch-major path.
    out2_fm = jax.block_until_ready(
        conductor_net_feature_major(jnp.transpose(x2), params))
    assert out2_fm.shape == (2, B2)
    assert jnp.allclose(jnp.transpose(out2_fm), out2, atol=1e-6, rtol=1e-6), \
        "feature-major path disagrees with batch-major path"

    print("KERNEL_OK")
</pallas_src>

<mosaic_0001>
module attributes {stable_mosaic.version = 11 : i64} {
  func.func @conductor_kernel(%arg0: i32, %arg1: memref<8x1024xbf16, #tpu.memory_space<vmem>>, %arg2: memref<16x8xf32, #tpu.memory_space<vmem>>, %arg3: memref<16x1xf32, #tpu.memory_space<vmem>>, %arg4: memref<16x16xf32, #tpu.memory_space<vmem>>, %arg5: memref<16x1xf32, #tpu.memory_space<vmem>>, %arg6: memref<16x16xf32, #tpu.memory_space<vmem>>, %arg7: memref<16x1xf32, #tpu.memory_space<vmem>>, %arg8: memref<2x16xf32, #tpu.memory_space<vmem>>, %arg9: memref<2x1xf32, #tpu.memory_space<vmem>>, %arg10: memref<2x1024xf32, #tpu.memory_space<vmem>>) attributes {dimension_semantics = [#tpu.dimension_semantics<parallel>], iteration_bounds = array<i64: 1>, scalar_prefetch = 0 : i64, scratch_operands = 0 : i64, tpu.core_type = #tpu.core_type<tc>, window_params = [{transform_indices = @transform_0, window_bounds = array<i64: 8, 1024>}, {pipeline_mode = #tpu.pipeline_mode<synchronous>, transform_indices = @transform_1, window_bounds = array<i64: 16, 8>}, {pipeline_mode = #tpu.pipeline_mode<synchronous>, transform_indices = @transform_2, window_bounds = array<i64: 16, 1>}, {pipeline_mode = #tpu.pipeline_mode<synchronous>, transform_indices = @transform_3, window_bounds = array<i64: 16, 16>}, {pipeline_mode = #tpu.pipeline_mode<synchronous>, transform_indices = @transform_4, window_bounds = array<i64: 16, 1>}, {pipeline_mode = #tpu.pipeline_mode<synchronous>, transform_indices = @transform_5, window_bounds = array<i64: 16, 16>}, {pipeline_mode = #tpu.pipeline_mode<synchronous>, transform_indices = @transform_6, window_bounds = array<i64: 16, 1>}, {pipeline_mode = #tpu.pipeline_mode<synchronous>, transform_indices = @transform_7, window_bounds = array<i64: 2, 16>}, {pipeline_mode = #tpu.pipeline_mode<synchronous>, transform_indices = @transform_8, window_bounds = array<i64: 2, 1>}, {transform_indices = @transform_9, window_bounds = array<i64: 2, 1024>}]} {
    %c0 = arith.constant 0 : index
    %c0_0 = arith.constant 0 : index
    %0 = vector.load %arg1[%c0, %c0_0] : memref<8x1024xbf16, #tpu.memory_space<vmem>>, vector<8x1024xbf16>
    %1 = arith.extf %0 : vector<8x1024xbf16> to vector<8x1024xf32>
    %c0_1 = arith.constant 0 : index
    %c0_2 = arith.constant 0 : index
    %2 = vector.load %arg2[%c0_1, %c0_2] : memref<16x8xf32, #tpu.memory_space<vmem>>, vector<16x8xf32>
    %cst = arith.constant dense<0.000000e+00> : vector<16x1024xf32>
    %3 = tpu.matmul %2, %1, %cst {dimension_numbers = #tpu.dot_dimension_numbers<[1], [0], [0], [1], [0, 0, 1, 1], [], []>} : vector<16x8xf32>, vector<8x1024xf32>, vector<16x1024xf32> -> vector<16x1024xf32>
    %c0_3 = arith.constant 0 : index
    %c0_4 = arith.constant 0 : index
    %4 = vector.load %arg3[%c0_3, %c0_4] : memref<16x1xf32, #tpu.memory_space<vmem>>, vector<16x1xf32>
    %5 = vector.broadcast %4 : vector<16x1xf32> to vector<16x1024xf32>
    %6 = arith.addf %3, %5 : vector<16x1024xf32>
    %cst_5 = arith.constant 0.000000e+00 : f32
    %7 = vector.broadcast %cst_5 : f32 to vector<16x1024xf32>
    %8 = arith.maximumf %6, %7 : vector<16x1024xf32>
    %c0_6 = arith.constant 0 : index
    %c0_7 = arith.constant 0 : index
    %9 = vector.load %arg4[%c0_6, %c0_7] : memref<16x16xf32, #tpu.memory_space<vmem>>, vector<16x16xf32>
    %cst_8 = arith.constant dense<0.000000e+00> : vector<16x1024xf32>
    %10 = tpu.matmul %9, %8, %cst_8 {dimension_numbers = #tpu.dot_dimension_numbers<[1], [0], [0], [1], [0, 0, 1, 1], [], []>} : vector<16x16xf32>, vector<16x1024xf32>, vector<16x1024xf32> -> vector<16x1024xf32>
    %c0_9 = arith.constant 0 : index
    %c0_10 = arith.constant 0 : index
    %11 = vector.load %arg5[%c0_9, %c0_10] : memref<16x1xf32, #tpu.memory_space<vmem>>, vector<16x1xf32>
    %12 = vector.broadcast %11 : vector<16x1xf32> to vector<16x1024xf32>
    %13 = arith.addf %10, %12 : vector<16x1024xf32>
    %cst_11 = arith.constant 0.000000e+00 : f32
    %14 = vector.broadcast %cst_11 : f32 to vector<16x1024xf32>
    %15 = arith.maximumf %13, %14 : vector<16x1024xf32>
    %c0_12 = arith.constant 0 : index
    %c0_13 = arith.constant 0 : index
    %16 = vector.load %arg6[%c0_12, %c0_13] : memref<16x16xf32, #tpu.memory_space<vmem>>, vector<16x16xf32>
    %cst_14 = arith.constant dense<0.000000e+00> : vector<16x1024xf32>
    %17 = tpu.matmul %16, %15, %cst_14 {dimension_numbers = #tpu.dot_dimension_numbers<[1], [0], [0], [1], [0, 0, 1, 1], [], []>} : vector<16x16xf32>, vector<16x1024xf32>, vector<16x1024xf32> -> vector<16x1024xf32>
    %c0_15 = arith.constant 0 : index
    %c0_16 = arith.constant 0 : index
    %18 = vector.load %arg7[%c0_15, %c0_16] : memref<16x1xf32, #tpu.memory_space<vmem>>, vector<16x1xf32>
    %19 = vector.broadcast %18 : vector<16x1xf32> to vector<16x1024xf32>
    %20 = arith.addf %17, %19 : vector<16x1024xf32>
    %cst_17 = arith.constant 0.000000e+00 : f32
    %21 = vector.broadcast %cst_17 : f32 to vector<16x1024xf32>
    %22 = arith.maximumf %20, %21 : vector<16x1024xf32>
    %c0_18 = arith.constant 0 : index
    %c0_19 = arith.constant 0 : index
    %23 = vector.load %arg8[%c0_18, %c0_19] : memref<2x16xf32, #tpu.memory_space<vmem>>, vector<2x16xf32>
    %cst_20 = arith.constant dense<0.000000e+00> : vector<2x1024xf32>
    %24 = tpu.matmul %23, %22, %cst_20 {dimension_numbers = #tpu.dot_dimension_numbers<[1], [0], [0], [1], [0, 0, 1, 1], [], []>} : vector<2x16xf32>, vector<16x1024xf32>, vector<2x1024xf32> -> vector<2x1024xf32>
    %c0_21 = arith.constant 0 : index
    %c0_22 = arith.constant 0 : index
    %25 = vector.load %arg9[%c0_21, %c0_22] : memref<2x1xf32, #tpu.memory_space<vmem>>, vector<2x1xf32>
    %26 = vector.broadcast %25 : vector<2x1xf32> to vector<2x1024xf32>
    %27 = arith.addf %24, %26 : vector<2x1024xf32>
    %c0_23 = arith.constant 0 : index
    %c0_24 = arith.constant 0 : index
    %28 = vector.load %arg10[%c0_23, %c0_24] : memref<2x1024xf32, #tpu.memory_space<vmem>>, vector<2x1024xf32>
    tpu.vector_store %arg10[%c0_23, %c0_24], %27 {strides = array<i32>} : memref<2x1024xf32, #tpu.memory_space<vmem>>, vector<2x1024xf32>,
    return
  }
  func.func @transform_0(%arg0: i32) -> (i32, i32) {
    %c0_i32 = arith.constant 0 : i32
    %c0_i32_0 = arith.constant 0 : i32
    return %c0_i32, %arg0 : i32, i32
  }
  func.func @transform_1(%arg0: i32) -> (i32, i32) {
    %c0_i32 = arith.constant 0 : i32
    %c0_i32_0 = arith.constant 0 : i32
    %c0_i32_1 = arith.constant 0 : i32
    return %c0_i32, %c0_i32_0 : i32, i32
  }
  func.func @transform_2(%arg0: i32) -> (i32, i32) {
    %c0_i32 = arith.constant 0 : i32
    %c0_i32_0 = arith.constant 0 : i32
    %c0_i32_1 = arith.constant 0 : i32
    return %c0_i32, %c0_i32_0 : i32, i32
  }
  func.func @transform_3(%arg0: i32) -> (i32, i32) {
    %c0_i32 = arith.constant 0 : i32
    %c0_i32_0 = arith.constant 0 : i32
    %c0_i32_1 = arith.constant 0 : i32
    return %c0_i32, %c0_i32_0 : i32, i32
  }
  func.func @transform_4(%arg0: i32) -> (i32, i32) {
    %c0_i32 = arith.constant 0 : i32
    %c0_i32_0 = arith.constant 0 : i32
    %c0_i32_1 = arith.constant 0 : i32
    return %c0_i32, %c0_i32_0 : i32, i32
  }
  func.func @transform_5(%arg0: i32) -> (i32, i32) {
    %c0_i32 = arith.constant 0 : i32
    %c0_i32_0 = arith.constant 0 : i32
    %c0_i32_1 = arith.constant 0 : i32
    return %c0_i32, %c0_i32_0 : i32, i32
  }
  func.func @transform_6(%arg0: i32) -> (i32, i32) {
    %c0_i32 = arith.constant 0 : i32
    %c0_i32_0 = arith.constant 0 : i32
    %c0_i32_1 = arith.constant 0 : i32
    return %c0_i32, %c0_i32_0 : i32, i32
  }
  func.func @transform_7(%arg0: i32) -> (i32, i32) {
    %c0_i32 = arith.constant 0 : i32
    %c0_i32_0 = arith.constant 0 : i32
    %c0_i32_1 = arith.constant 0 : i32
    return %c0_i32, %c0_i32_0 : i32, i32
  }
  func.func @transform_8(%arg0: i32) -> (i32, i32) {
    %c0_i32 = arith.constant 0 : i32
    %c0_i32_0 = arith.constant 0 : i32
    %c0_i32_1 = arith.constant 0 : i32
    return %c0_i32, %c0_i32_0 : i32, i32
  }
  func.func @transform_9(%arg0: i32) -> (i32, i32) {
    %c0_i32 = arith.constant 0 : i32
    %c0_i32_0 = arith.constant 0 : i32
    return %c0_i32, %arg0 : i32, i32
  }
}

</mosaic_0001>

<llo_original>
// kernel: conductor_net.1
$region0: #{conductor_net.1}
  #allocation0 [shape = 'u32[]', space=smem, size = 0x4, offset = 0x4, fixed_abs, tag = 'smem constant byte address 0x4 - core index']
  #allocation1 [shape = 'u32[72,128]{1,0:T(1,128)}', space=vmem, size = 0x9000, scoped, tag = 'internal scratch']
  %s0 = inlined_call_operand.vmem [shape: bf16[8,1024], index: 0, kind: input, shape index: {}]
  %s1 = inlined_call_operand.vmem [shape: f32[16,8], index: 1, kind: input, shape index: {}]
  %s2 = inlined_call_operand.vmem [shape: f32[16,1], index: 2, kind: input, shape index: {}]
  %s3 = inlined_call_operand.vmem [shape: f32[16,16], index: 3, kind: input, shape index: {}]
  %s4 = inlined_call_operand.vmem [shape: f32[16,1], index: 4, kind: input, shape index: {}]
  %s5 = inlined_call_operand.vmem [shape: f32[16,16], index: 5, kind: input, shape index: {}]
  %s6 = inlined_call_operand.vmem [shape: f32[16,1], index: 6, kind: input, shape index: {}]
  %s7 = inlined_call_operand.vmem [shape: f32[2,16], index: 7, kind: input, shape index: {}]
  %s8 = inlined_call_operand.vmem [shape: f32[2,1], index: 8, kind: input, shape index: {}]
  %s9 = inlined_call_operand.vmem [shape: f32[2,1024], index: 9, kind: output, shape index: {}]
  %s10 = sld [smem:[#allocation0]]
  $region46: #{conductor_net.1} parent=0
    _
  %s12 = ssub.s32 1, %s10
  %s13 = scalar_select 0, %s12, %s10
  // Predicated region
  $region2: #{conductor_net.1} parent=0 // pred_check
    _
  $region3: #{conductor_net.1} parent=0 // pred_check_branch
    %15 = sbr.rel (0) target = $region5
  $region4: #{conductor_net.1} parent=0 // pred_region
    _
  $region5: #{conductor_net.1} parent=0 // pred_fallthru
    _
  // Predicated region
  $region6: #{conductor_net.1} parent=0 // pred_check
    _
  $region7: #{conductor_net.1} parent=0 // pred_check_branch
    %17 = sbr.rel (0) target = $region9
  $region8: #{conductor_net.1} parent=0 // pred_region
    _
  $region9: #{conductor_net.1} parent=0 // pred_fallthru
    _
  // Predicated region
  $region10: #{conductor_net.1} parent=0 // pred_check
    _
  $region11: #{conductor_net.1} parent=0 // pred_check_branch
    %19 = sbr.rel (0) target = $region13
  $region12: #{conductor_net.1} parent=0 // pred_region
    _
  $region13: #{conductor_net.1} parent=0 // pred_fallthru
    _
  // Predicated region
  $region14: #{conductor_net.1} parent=0 // pred_check
    _
  $region15: #{conductor_net.1} parent=0 // pred_check_branch
    %21 = sbr.rel (0) target = $region17
  $region16: #{conductor_net.1} parent=0 // pred_region
    _
  $region17: #{conductor_net.1} parent=0 // pred_fallthru
    _
  // Predicated region
  $region18: #{conductor_net.1} parent=0 // pred_check
    _
  $region19: #{conductor_net.1} parent=0 // pred_check_branch
    %23 = sbr.rel (0) target = $region21
  $region20: #{conductor_net.1} parent=0 // pred_region
    _
  $region21: #{conductor_net.1} parent=0 // pred_fallthru
    _
  // Predicated region
  $region22: #{conductor_net.1} parent=0 // pred_check
    _
  $region23: #{conductor_net.1} parent=0 // pred_check_branch
    %25 = sbr.rel (0) target = $region25
  $region24: #{conductor_net.1} parent=0 // pred_region
    _
  $region25: #{conductor_net.1} parent=0 // pred_fallthru
    _
  // Predicated region
  $region26: #{conductor_net.1} parent=0 // pred_check
    _
  $region27: #{conductor_net.1} parent=0 // pred_check_branch
    %27 = sbr.rel (0) target = $region29
  $region28: #{conductor_net.1} parent=0 // pred_region
    _
  $region29: #{conductor_net.1} parent=0 // pred_fallthru
    _
  // Predicated region
  $region30: #{conductor_net.1} parent=0 // pred_check
    _
  $region31: #{conductor_net.1} parent=0 // pred_check_branch
    %29 = sbr.rel (0) target = $region33
  $region32: #{conductor_net.1} parent=0 // pred_region
    _
  $region33: #{conductor_net.1} parent=0 // pred_fallthru
    _
  // Predicated region
  $region34: #{conductor_net.1} parent=0 // pred_check
    _
  $region35: #{conductor_net.1} parent=0 // pred_check_branch
    %31 = sbr.rel (0) target = $region37
  $region36: #{conductor_net.1} parent=0 // pred_region
    _
  $region37: #{conductor_net.1} parent=0 // pred_fallthru
    _
  %v32 = vld [vmem:[%s0] sm:$0xff]
  %v33 = vld [vmem:[%s0 + $0x8] sm:$0xff]
  %v34 = vld [vmem:[%s0 + $0x10] sm:$0xff]
  %v35 = vld [vmem:[%s0 + $0x18] sm:$0xff]
  %v36 = vunpack.c.l.bf16 %v32
  %v37 = vunpack.c.h.bf16 %v32
  %v38 = vunpack.c.l.bf16 %v33
  %v39 = vunpack.c.h.bf16 %v33
  %v40 = vunpack.c.l.bf16 %v34
  %v41 = vunpack.c.h.bf16 %v34
  %v42 = vunpack.c.l.bf16 %v35
  %v43 = vunpack.c.h.bf16 %v35
  %v44 = vld [vmem:[%s1] sm:$0xff]
  %v45 = vld [vmem:[%s1 + $0x8] sm:$0xff]
  %v46 = vld [vmem:[%s2] sm:$0xff]
  %v47 = vld [vmem:[%s2 + $0x8] sm:$0xff]
  %49 = vset.pattern.permute.xlu0 0
  %50 = vperm.xlu0 %49, %v46
  %v51 = vpop.permute.xlu0 %50
  %54 = vset.pattern.permute.xlu0 0
  %55 = vperm.xlu0 %54, %v47
  %v56 = vpop.permute.xlu0 %55
  %vm58 = vcmask 64512
  %v60 = vsel %vm58, %v44, 0
  %v63 = vsel %vm58, %v45, 0
  %65 = vmatpush.msra.mxu0 0.0
  %66 = vmatpush.msra.mxu0 0.0
  %67 = vmatpush.msra.mxu0 0.0
  %68 = vmatpush.msra.mxu0 0.0
  %69 = vmatpush.msra.mxu0 0.0
  %70 = vmatpush.msra.mxu0 0.0
  %71 = vmatpush.msra.mxu0 0.0
  %72 = vmatpush.msra.mxu0 0.0
  %73 = vmatpush.msra.mxu0 0.0
  %74 = vmatpush.msra.mxu0 0.0
  %75 = vmatpush.msra.mxu0 0.0
  %76 = vmatpush.msra.mxu0 0.0
  %77 = vmatpush.msra.mxu0 0.0
  %78 = vmatpush.msra.mxu0 0.0
  %79 = vmatpush.msra.mxu0 0.0
  %80 = vmatpush.msra.mxu0 %v36
  %81 = vmatmul.f32.gmra.mxu0 %v60
  %v82 = vpop.f32.mrf.mxu0
  %v83 = vadd.f32 %v51, %v82
  %84 = vmatmul.f32.gmra.mxu0 %v63
  %v85 = vpop.f32.mrf.mxu0
  %v86 = vadd.f32 %v56, %v85
  %87 = vdwg.mxu0
  %88 = vmatpush.msra.mxu0 0.0
  %89 = vmatpush.msra.mxu0 0.0
  %90 = vmatpush.msra.mxu0 0.0
  %91 = vmatpush.msra.mxu0 0.0
  %92 = vmatpush.msra.mxu0 0.0
  %93 = vmatpush.msra.mxu0 0.0
  %94 = vmatpush.msra.mxu0 0.0
  %95 = vmatpush.msra.mxu0 0.0
  %96 = vmatpush.msra.mxu0 0.0
  %97 = vmatpush.msra.mxu0 0.0
  %98 = vmatpush.msra.mxu0 0.0
  %99 = vmatpush.msra.mxu0 0.0
  %100 = vmatpush.msra.mxu0 0.0
  %101 = vmatpush.msra.mxu0 0.0
  %102 = vmatpush.msra.mxu0 0.0
  %103 = vmatpush.msra.mxu0 %v37
  %104 = vmatmul.f32.gmra.mxu0 %v60
  %v105 = vpop.f32.mrf.mxu0
  %v106 = vadd.f32 %v51, %v105
  %107 = vmatmul.f32.gmra.mxu0 %v63
  %v108 = vpop.f32.mrf.mxu0
  %v109 = vadd.f32 %v56, %v108
  %110 = vdwg.mxu0
  %111 = vmatpush.msra.mxu0 0.0
  %112 = vmatpush.msra.mxu0 0.0
  %113 = vmatpush.msra.mxu0 0.0
  %114 = vmatpush.msra.mxu0 0.0
  %115 = vmatpush.msra.mxu0 0.0
  %116 = vmatpush.msra.mxu0 0.0
  %117 = vmatpush.msra.mxu0 0.0
  %118 = vmatpush.msra.mxu0 0.0
  %119 = vmatpush.msra.mxu0 0.0
  %120 = vmatpush.msra.mxu0 0.0
  %121 = vmatpush.msra.mxu0 0.0
  %122 = vmatpush.msra.mxu0 0.0
  %123 = vmatpush.msra.mxu0 0.0
  %124 = vmatpush.msra.mxu0 0.0
  %125 = vmatpush.msra.mxu0 0.0
  %126 = vmatpush.msra.mxu0 %v38
  %127 = vmatmul.f32.gmra.mxu0 %v60
  %v128 = vpop.f32.mrf.mxu0
  %v129 = vadd.f32 %v51, %v128
  %130 = vmatmul.f32.gmra.mxu0 %v63
  %v131 = vpop.f32.mrf.mxu0
  %v132 = vadd.f32 %v56, %v131
  %133 = vdwg.mxu0
  %134 = vmatpush.msra.mxu0 0.0
  %135 = vmatpush.msra.mxu0 0.0
  %136 = vmatpush.msra.mxu0 0.0
  %137 = vmatpush.msra.mxu0 0.0
  %138 = vmatpush.msra.mxu0 0.0
  %139 = vmatpush.msra.mxu0 0.0
  %140 = vmatpush.msra.mxu0 0.0
  %141 = vmatpush.msra.mxu0 0.0
  %142 = vmatpush.msra.mxu0 0.0
  %143 = vmatpush.msra.mxu0 0.0
  %144 = vmatpush.msra.mxu0 0.0
  %145 = vmatpush.msra.mxu0 0.0
  %146 = vmatpush.msra.mxu0 0.0
  %147 = vmatpush.msra.mxu0 0.0
  %148 = vmatpush.msra.mxu0 0.0
  %149 = vmatpush.msra.mxu0 %v39
  %150 = vmatmul.f32.gmra.mxu0 %v60
  %v151 = vpop.f32.mrf.mxu0
  %v152 = vadd.f32 %v51, %v151
  %153 = vmatmul.f32.gmra.mxu0 %v63
  %v154 = vpop.f32.mrf.mxu0
  %v155 = vadd.f32 %v56, %v154
  %156 = vdwg.mxu0
  %157 = vmatpush.msra.mxu0 0.0
  %158 = vmatpush.msra.mxu0 0.0
  %159 = vmatpush.msra.mxu0 0.0
  %160 = vmatpush.msra.mxu0 0.0
  %161 = vmatpush.msra.mxu0 0.0
  %162 = vmatpush.msra.mxu0 0.0
  %163 = vmatpush.msra.mxu0 0.0
  %164 = vmatpush.msra.mxu0 0.0
  %165 = vmatpush.msra.mxu0 0.0
  %166 = vmatpush.msra.mxu0 0.0
  %167 = vmatpush.msra.mxu0 0.0
  %168 = vmatpush.msra.mxu0 0.0
  %169 = vmatpush.msra.mxu0 0.0
  %170 = vmatpush.msra.mxu0 0.0
  %171 = vmatpush.msra.mxu0 0.0
  %172 = vmatpush.msra.mxu0 %v40
  %173 = vmatmul.f32.gmra.mxu0 %v60
  %v174 = vpop.f32.mrf.mxu0
  %v175 = vadd.f32 %v51, %v174
  %176 = vmatmul.f32.gmra.mxu0 %v63
  %v177 = vpop.f32.mrf.mxu0
  %v178 = vadd.f32 %v56, %v177
  %179 = vdwg.mxu0
  %180 = vmatpush.msra.mxu0 0.0
  %181 = vmatpush.msra.mxu0 0.0
  %182 = vmatpush.msra.mxu0 0.0
  %183 = vmatpush.msra.mxu0 0.0
  %184 = vmatpush.msra.mxu0 0.0
  %185 = vmatpush.msra.mxu0 0.0
  %186 = vmatpush.msra.mxu0 0.0
  %187 = vmatpush.msra.mxu0 0.0
  %188 = vmatpush.msra.mxu0 0.0
  %189 = vmatpush.msra.mxu0 0.0
  %190 = vmatpush.msra.mxu0 0.0
  %191 = vmatpush.msra.mxu0 0.0
  %192 = vmatpush.msra.mxu0 0.0
  %193 = vmatpush.msra.mxu0 0.0
  %194 = vmatpush.msra.mxu0 0.0
  %195 = vmatpush.msra.mxu0 %v41
  %196 = vmatmul.f32.gmra.mxu0 %v60
  %v197 = vpop.f32.mrf.mxu0
  %v198 = vadd.f32 %v51, %v197
  %199 = vmatmul.f32.gmra.mxu0 %v63
  %v200 = vpop.f32.mrf.mxu0
  %v201 = vadd.f32 %v56, %v200
  %202 = vdwg.mxu0
  %203 = vmatpush.msra.mxu0 0.0
  %204 = vmatpush.msra.mxu0 0.0
  %205 = vmatpush.msra.mxu0 0.0
  %206 = vmatpush.msra.mxu0 0.0
  %207 = vmatpush.msra.mxu0 0.0
  %208 = vmatpush.msra.mxu0 0.0
  %209 = vmatpush.msra.mxu0 0.0
  %210 = vmatpush.msra.mxu0 0.0
  %211 = vmatpush.msra.mxu0 0.0
  %212 = vmatpush.msra.mxu0 0.0
  %213 = vmatpush.msra.mxu0 0.0
  %214 = vmatpush.msra.mxu0 0.0
  %215 = vmatpush.msra.mxu0 0.0
  %216 = vmatpush.msra.mxu0 0.0
  %217 = vmatpush.msra.mxu0 0.0
  %218 = vmatpush.msra.mxu0 %v42
  %219 = vmatmul.f32.gmra.mxu0 %v60
  %v220 = vpop.f32.mrf.mxu0
  %v221 = vadd.f32 %v51, %v220
  %222 = vmatmul.f32.gmra.mxu0 %v63
  %v223 = vpop.f32.mrf.mxu0
  %v224 = vadd.f32 %v56, %v223
  %225 = vdwg.mxu0
  %226 = vmatpush.msra.mxu0 0.0
  %227 = vmatpush.msra.mxu0 0.0
  %228 = vmatpush.msra.mxu0 0.0
  %229 = vmatpush.msra.mxu0 0.0
  %230 = vmatpush.msra.mxu0 0.0
  %231 = vmatpush.msra.mxu0 0.0
  %232 = vmatpush.msra.mxu0 0.0
  %233 = vmatpush.msra.mxu0 0.0
  %234 = vmatpush.msra.mxu0 0.0
  %235 = vmatpush.msra.mxu0 0.0
  %236 = vmatpush.msra.mxu0 0.0
  %237 = vmatpush.msra.mxu0 0.0
  %238 = vmatpush.msra.mxu0 0.0
  %239 = vmatpush.msra.mxu0 0.0
  %240 = vmatpush.msra.mxu0 0.0
  %241 = vmatpush.msra.mxu0 %v43
  %242 = vmatmul.f32.gmra.mxu0 %v60
  %v243 = vpop.f32.mrf.mxu0
  %v244 = vadd.f32 %v51, %v243
  %245 = vmatmul.f32.gmra.mxu0 %v63
  %v246 = vpop.f32.mrf.mxu0
  %v247 = vadd.f32 %v56, %v246
  %248 = vdwg.mxu0
  %v249 = vmax.f32 %v83, 0.0
  %v250 = vmax.f32 %v106, 0.0
  %v251 = vmax.f32 %v129, 0.0
  %v252 = vmax.f32 %v152, 0.0
  %v253 = vmax.f32 %v175, 0.0
  %v254 = vmax.f32 %v198, 0.0
  %v255 = vmax.f32 %v221, 0.0
  %v256 = vmax.f32 %v244, 0.0
  %v257 = vmax.f32 %v86, 0.0
  %v258 = vmax.f32 %v109, 0.0
  %v259 = vmax.f32 %v132, 0.0
  %v260 = vmax.f32 %v155, 0.0
  %v261 = vmax.f32 %v178, 0.0
  %v262 = vmax.f32 %v201, 0.0
  %v263 = vmax.f32 %v224, 0.0
  %v264 = vmax.f32 %v247, 0.0
  %v265 = vld [vmem:[%s3] sm:$0xff]
  %v266 = vld [vmem:[%s3 + $0x8] sm:$0xff]
  %v267 = vld [vmem:[%s4] sm:$0xff]
  %v268 = vld [vmem:[%s4 + $0x8] sm:$0xff]
  %270 = vset.pattern.permute.xlu0 0
  %271 = vperm.xlu0 %270, %v267
  %v272 = vpop.permute.xlu0 %271
  %275 = vset.pattern.permute.xlu0 0
  %276 = vperm.xlu0 %275, %v268
  %v277 = vpop.permute.xlu0 %276
  %vm279 = vcmask 130048
  %v281 = vsel %vm279, %v265, 0
  %v284 = vsel %vm279, %v266, 0
  %286 = vmatpush.msra.mxu0 0.0
  %287 = vmatpush.msra.mxu0 0.0
  %288 = vmatpush.msra.mxu0 0.0
  %289 = vmatpush.msra.mxu0 0.0
  %290 = vmatpush.msra.mxu0 0.0
  %291 = vmatpush.msra.mxu0 0.0
  %292 = vmatpush.msra.mxu0 0.0
  %293 = vmatpush.msra.mxu0 0.0
  %294 = vmatpush.msra.mxu0 0.0
  %295 = vmatpush.msra.mxu0 0.0
  %296 = vmatpush.msra.mxu0 0.0
  %297 = vmatpush.msra.mxu0 0.0
  %298 = vmatpush.msra.mxu0 0.0
  %299 = vmatpush.msra.mxu0 0.0
  %300 = vmatpush.msra.mxu0 %v257
  %301 = vmatpush.msra.mxu0 %v249
  %302 = vmatmul.f32.gmra.mxu0 %v281
  %v303 = vpop.f32.mrf.mxu0
  %v304 = vadd.f32 %v272, %v303
  %305 = vmatmul.f32.gmra.mxu0 %v284
  %v306 = vpop.f32.mrf.mxu0
  %v307 = vadd.f32 %v277, %v306
  %308 = vdwg.mxu0
  %309 = vmatpush.msra.mxu0 0.0
  %310 = vmatpush.msra.mxu0 0.0
  %311 = vmatpush.msra.mxu0 0.0
  %312 = vmatpush.msra.mxu0 0.0
  %313 = vmatpush.msra.mxu0 0.0
  %314 = vmatpush.msra.mxu0 0.0
  %315 = vmatpush.msra.mxu0 0.0
  %316 = vmatpush.msra.mxu0 0.0
  %317 = vmatpush.msra.mxu0 0.0
  %318 = vmatpush.msra.mxu0 0.0
  %319 = vmatpush.msra.mxu0 0.0
  %320 = vmatpush.msra.mxu0 0.0
  %321 = vmatpush.msra.mxu0 0.0
  %322 = vmatpush.msra.mxu0 0.0
  %323 = vmatpush.msra.mxu0 %v258
  %324 = vmatpush.msra.mxu0 %v250
  %325 = vmatmul.f32.gmra.mxu0 %v281
  %v326 = vpop.f32.mrf.mxu0
  %v327 = vadd.f32 %v272, %v326
  %328 = vmatmul.f32.gmra.mxu0 %v284
  %v329 = vpop.f32.mrf.mxu0
  %v330 = vadd.f32 %v277, %v329
  %331 = vdwg.mxu0
  %332 = vmatpush.msra.mxu0 0.0
  %333 = vmatpush.msra.mxu0 0.0
  %334 = vmatpush.msra.mxu0 0.0
  %335 = vmatpush.msra.mxu0 0.0
  %336 = vmatpush.msra.mxu0 0.0
  %337 = vmatpush.msra.mxu0 0.0
  %338 = vmatpush.msra.mxu0 0.0
  %339 = vmatpush.msra.mxu0 0.0
  %340 = vmatpush.msra.mxu0 0.0
  %341 = vmatpush.msra.mxu0 0.0
  %342 = vmatpush.msra.mxu0 0.0
  %343 = vmatpush.msra.mxu0 0.0
  %344 = vmatpush.msra.mxu0 0.0
  %345 = vmatpush.msra.mxu0 0.0
  %346 = vmatpush.msra.mxu0 %v259
  %347 = vmatpush.msra.mxu0 %v251
  %348 = vmatmul.f32.gmra.mxu0 %v281
  %v349 = vpop.f32.mrf.mxu0
  %v350 = vadd.f32 %v272, %v349
  %351 = vmatmul.f32.gmra.mxu0 %v284
  %v352 = vpop.f32.mrf.mxu0
  %v353 = vadd.f32 %v277, %v352
  %354 = vdwg.mxu0
  %355 = vmatpush.msra.mxu0 0.0
  %356 = vmatpush.msra.mxu0 0.0
  %357 = vmatpush.msra.mxu0 0.0
  %358 = vmatpush.msra.mxu0 0.0
  %359 = vmatpush.msra.mxu0 0.0
  %360 = vmatpush.msra.mxu0 0.0
  %361 = vmatpush.msra.mxu0 0.0
  %362 = vmatpush.msra.mxu0 0.0
  %363 = vmatpush.msra.mxu0 0.0
  %364 = vmatpush.msra.mxu0 0.0
  %365 = vmatpush.msra.mxu0 0.0
  %366 = vmatpush.msra.mxu0 0.0
  %367 = vmatpush.msra.mxu0 0.0
  %368 = vmatpush.msra.mxu0 0.0
  %369 = vmatpush.msra.mxu0 %v260
  %370 = vmatpush.msra.mxu0 %v252
  %371 = vmatmul.f32.gmra.mxu0 %v281
  %v372 = vpop.f32.mrf.mxu0
  %v373 = vadd.f32 %v272, %v372
  %374 = vmatmul.f32.gmra.mxu0 %v284
  %v375 = vpop.f32.mrf.mxu0
  %v376 = vadd.f32 %v277, %v375
  %377 = vdwg.mxu0
  %378 = vmatpush.msra.mxu0 0.0
  %379 = vmatpush.msra.mxu0 0.0
  %380 = vmatpush.msra.mxu0 0.0
  %381 = vmatpush.msra.mxu0 0.0
  %382 = vmatpush.msra.mxu0 0.0
  %383 = vmatpush.msra.mxu0 0.0
  %384 = vmatpush.msra.mxu0 0.0
  %385 = vmatpush.msra.mxu0 0.0
  %386 = vmatpush.msra.mxu0 0.0
  %387 = vmatpush.msra.mxu0 0.0
  %388 = vmatpush.msra.mxu0 0.0
  %389 = vmatpush.msra.mxu0 0.0
  %390 = vmatpush.msra.mxu0 0.0
  %391 = vmatpush.msra.mxu0 0.0
  %392 = vmatpush.msra.mxu0 %v261
  %393 = vmatpush.msra.mxu0 %v253
  %394 = vmatmul.f32.gmra.mxu0 %v281
  %v395 = vpop.f32.mrf.mxu0
  %v396 = vadd.f32 %v272, %v395
  %397 = vmatmul.f32.gmra.mxu0 %v284
  %v398 = vpop.f32.mrf.mxu0
  %v399 = vadd.f32 %v277, %v398
  %400 = vdwg.mxu0
  %401 = vmatpush.msra.mxu0 0.0
  %402 = vmatpush.msra.mxu0 0.0
  %403 = vmatpush.msra.mxu0 0.0
  %404 = vmatpush.msra.mxu0 0.0
  %405 = vmatpush.msra.mxu0 0.0
  %406 = vmatpush.msra.mxu0 0.0
  %407 = vmatpush.msra.mxu0 0.0
  %408 = vmatpush.msra.mxu0 0.0
  %409 = vmatpush.msra.mxu0 0.0
  %410 = vmatpush.msra.mxu0 0.0
  %411 = vmatpush.msra.mxu0 0.0
  %412 = vmatpush.msra.mxu0 0.0
  %413 = vmatpush.msra.mxu0 0.0
  %414 = vmatpush.msra.mxu0 0.0
  %415 = vmatpush.msra.mxu0 %v262
  %416 = vmatpush.msra.mxu0 %v254
  %417 = vmatmul.f32.gmra.mxu0 %v281
  %v418 = vpop.f32.mrf.mxu0
  %v419 = vadd.f32 %v272, %v418
  %420 = vmatmul.f32.gmra.mxu0 %v284
  %v421 = vpop.f32.mrf.mxu0
  %v422 = vadd.f32 %v277, %v421
  %423 = vdwg.mxu0
  %424 = vmatpush.msra.mxu0 0.0
  %425 = vmatpush.msra.mxu0 0.0
  %426 = vmatpush.msra.mxu0 0.0
  %427 = vmatpush.msra.mxu0 0.0
  %428 = vmatpush.msra.mxu0 0.0
  %429 = vmatpush.msra.mxu0 0.0
  %430 = vmatpush.msra.mxu0 0.0
  %431 = vmatpush.msra.mxu0 0.0
  %432 = vmatpush.msra.mxu0 0.0
  %433 = vmatpush.msra.mxu0 0.0
  %434 = vmatpush.msra.mxu0 0.0
  %435 = vmatpush.msra.mxu0 0.0
  %436 = vmatpush.msra.mxu0 0.0
  %437 = vmatpush.msra.mxu0 0.0
  %438 = vmatpush.msra.mxu0 %v263
  %439 = vmatpush.msra.mxu0 %v255
  %440 = vmatmul.f32.gmra.mxu0 %v281
  %v441 = vpop.f32.mrf.mxu0
  %v442 = vadd.f32 %v272, %v441
  %443 = vmatmul.f32.gmra.mxu0 %v284
  %v444 = vpop.f32.mrf.mxu0
  %v445 = vadd.f32 %v277, %v444
  %446 = vdwg.mxu0
  %447 = vmatpush.msra.mxu0 0.0
  %448 = vmatpush.msra.mxu0 0.0
  %449 = vmatpush.msra.mxu0 0.0
  %450 = vmatpush.msra.mxu0 0.0
  %451 = vmatpush.msra.mxu0 0.0
  %452 = vmatpush.msra.mxu0 0.0
  %453 = vmatpush.msra.mxu0 0.0
  %454 = vmatpush.msra.mxu0 0.0
  %455 = vmatpush.msra.mxu0 0.0
  %456 = vmatpush.msra.mxu0 0.0
  %457 = vmatpush.msra.mxu0 0.0
  %458 = vmatpush.msra.mxu0 0.0
  %459 = vmatpush.msra.mxu0 0.0
  %460 = vmatpush.msra.mxu0 0.0
  %461 = vmatpush.msra.mxu0 %v264
  %462 = vmatpush.msra.mxu0 %v256
  %463 = vmatmul.f32.gmra.mxu0 %v281
  %v464 = vpop.f32.mrf.mxu0
  %v465 = vadd.f32 %v272, %v464
  %466 = vmatmul.f32.gmra.mxu0 %v284
  %v467 = vpop.f32.mrf.mxu0
  %v468 = vadd.f32 %v277, %v467
  %469 = vdwg.mxu0
  %v470 = vmax.f32 %v304, 0.0
  %v471 = vmax.f32 %v327, 0.0
  %v472 = vmax.f32 %v350, 0.0
  %v473 = vmax.f32 %v373, 0.0
  %v474 = vmax.f32 %v396, 0.0
  %v475 = vmax.f32 %v419, 0.0
  %v476 = vmax.f32 %v442, 0.0
  %v477 = vmax.f32 %v465, 0.0
  %v478 = vmax.f32 %v307, 0.0
  %v479 = vmax.f32 %v330, 0.0
  %v480 = vmax.f32 %v353, 0.0
  %v481 = vmax.f32 %v376, 0.0
  %v482 = vmax.f32 %v399, 0.0
  %v483 = vmax.f32 %v422, 0.0
  %v484 = vmax.f32 %v445, 0.0
  %v485 = vmax.f32 %v468, 0.0
  %v486 = vld [vmem:[%s5] sm:$0xff]
  %v487 = vld [vmem:[%s5 + $0x8] sm:$0xff]
  %v488 = vld [vmem:[%s6] sm:$0xff]
  %v489 = vld [vmem:[%s6 + $0x8] sm:$0xff]
  %491 = vset.pattern.permute.xlu0 0
  %492 = vperm.xlu0 %491, %v488
  %v493 = vpop.permute.xlu0 %492
  %496 = vset.pattern.permute.xlu0 0
  %497 = vperm.xlu0 %496, %v489
  %v498 = vpop.permute.xlu0 %497
  %v501 = vsel %vm279, %v486, 0
  %v504 = vsel %vm279, %v487, 0
  %506 = vmatpush.msra.mxu0 0.0
  %507 = vmatpush.msra.mxu0 0.0
  %508 = vmatpush.msra.mxu0 0.0
  %509 = vmatpush.msra.mxu0 0.0
  %510 = vmatpush.msra.mxu0 0.0
  %511 = vmatpush.msra.mxu0 0.0
  %512 = vmatpush.msra.mxu0 0.0
  %513 = vmatpush.msra.mxu0 0.0
  %514 = vmatpush.msra.mxu0 0.0
  %515 = vmatpush.msra.mxu0 0.0
  %516 = vmatpush.msra.mxu0 0.0
  %517 = vmatpush.msra.mxu0 0.0
  %518 = vmatpush.msra.mxu0 0.0
  %519 = vmatpush.msra.mxu0 0.0
  %520 = vmatpush.msra.mxu0 %v478
  %521 = vmatpush.msra.mxu0 %v470
  %522 = vmatmul.f32.gmra.mxu0 %v501
  %v523 = vpop.f32.mrf.mxu0
  %v524 = vadd.f32 %v493, %v523
  %525 = vmatmul.f32.gmra.mxu0 %v504
  %v526 = vpop.f32.mrf.mxu0
  %v527 = vadd.f32 %v498, %v526
  %528 = vdwg.mxu0
  %529 = vmatpush.msra.mxu0 0.0
  %530 = vmatpush.msra.mxu0 0.0
  %531 = vmatpush.msra.mxu0 0.0
  %532 = vmatpush.msra.mxu0 0.0
  %533 = vmatpush.msra.mxu0 0.0
  %534 = vmatpush.msra.mxu0 0.0
  %535 = vmatpush.msra.mxu0 0.0
  %536 = vmatpush.msra.mxu0 0.0
  %537 = vmatpush.msra.mxu0 0.0
  %538 = vmatpush.msra.mxu0 0.0
  %539 = vmatpush.msra.mxu0 0.0
  %540 = vmatpush.msra.mxu0 0.0
  %541 = vmatpush.msra.mxu0 0.0
  %542 = vmatpush.msra.mxu0 0.0
  %543 = vmatpush.msra.mxu0 %v479
  %544 = vmatpush.msra.mxu0 %v471
  %545 = vmatmul.f32.gmra.mxu0 %v501
  %v546 = vpop.f32.mrf.mxu0
  %v547 = vadd.f32 %v493, %v546
  %548 = vmatmul.f32.gmra.mxu0 %v504
  %v549 = vpop.f32.mrf.mxu0
  %v550 = vadd.f32 %v498, %v549
  %551 = vdwg.mxu0
  %552 = vmatpush.msra.mxu0 0.0
  %553 = vmatpush.msra.mxu0 0.0
  %554 = vmatpush.msra.mxu0 0.0
  %555 = vmatpush.msra.mxu0 0.0
  %556 = vmatpush.msra.mxu0 0.0
  %557 = vmatpush.msra.mxu0 0.0
  %558 = vmatpush.msra.mxu0 0.0
  %559 = vmatpush.msra.mxu0 0.0
  %560 = vmatpush.msra.mxu0 0.0
  %561 = vmatpush.msra.mxu0 0.0
  %562 = vmatpush.msra.mxu0 0.0
  %563 = vmatpush.msra.mxu0 0.0
  %564 = vmatpush.msra.mxu0 0.0
  %565 = vmatpush.msra.mxu0 0.0
  %566 = vmatpush.msra.mxu0 %v480
  %567 = vmatpush.msra.mxu0 %v472
  %568 = vmatmul.f32.gmra.mxu0 %v501
  %v569 = vpop.f32.mrf.mxu0
  %v570 = vadd.f32 %v493, %v569
  %571 = vmatmul.f32.gmra.mxu0 %v504
  %v572 = vpop.f32.mrf.mxu0
  %v573 = vadd.f32 %v498, %v572
  %574 = vdwg.mxu0
  %575 = vmatpush.msra.mxu0 0.0
  %576 = vmatpush.msra.mxu0 0.0
  %577 = vmatpush.msra.mxu0 0.0
  %578 = vmatpush.msra.mxu0 0.0
  %579 = vmatpush.msra.mxu0 0.0
  %580 = vmatpush.msra.mxu0 0.0
  %581 = vmatpush.msra.mxu0 0.0
  %582 = vmatpush.msra.mxu0 0.0
  %583 = vmatpush.msra.mxu0 0.0
  %584 = vmatpush.msra.mxu0 0.0
  %585 = vmatpush.msra.mxu0 0.0
  %586 = vmatpush.msra.mxu0 0.0
  %587 = vmatpush.msra.mxu0 0.0
  %588 = vmatpush.msra.mxu0 0.0
  %589 = vmatpush.msra.mxu0 %v481
  %590 = vmatpush.msra.mxu0 %v473
  %591 = vmatmul.f32.gmra.mxu0 %v501
  %v592 = vpop.f32.mrf.mxu0
  %v593 = vadd.f32 %v493, %v592
  %594 = vmatmul.f32.gmra.mxu0 %v504
  %v595 = vpop.f32.mrf.mxu0
  %v596 = vadd.f32 %v498, %v595
  %597 = vdwg.mxu0
  %598 = vmatpush.msra.mxu0 0.0
  %599 = vmatpush.msra.mxu0 0.0
  %600 = vmatpush.msra.mxu0 0.0
  %601 = vmatpush.msra.mxu0 0.0
  %602 = vmatpush.msra.mxu0 0.0
  %603 = vmatpush.msra.mxu0 0.0
  %604 = vmatpush.msra.mxu0 0.0
  %605 = vmatpush.msra.mxu0 0.0
  %606 = vmatpush.msra.mxu0 0.0
  %607 = vmatpush.msra.mxu0 0.0
  %608 = vmatpush.msra.mxu0 0.0
  %609 = vmatpush.msra.mxu0 0.0
  %610 = vmatpush.msra.mxu0 0.0
  %611 = vmatpush.msra.mxu0 0.0
  %612 = vmatpush.msra.mxu0 %v482
  %613 = vmatpush.msra.mxu0 %v474
  %614 = vmatmul.f32.gmra.mxu0 %v501
  %v615 = vpop.f32.mrf.mxu0
  %v616 = vadd.f32 %v493, %v615
  %617 = vmatmul.f32.gmra.mxu0 %v504
  %v618 = vpop.f32.mrf.mxu0
  %v619 = vadd.f32 %v498, %v618
  %620 = vdwg.mxu0
  %621 = vmatpush.msra.mxu0 0.0
  %622 = vmatpush.msra.mxu0 0.0
  %623 = vmatpush.msra.mxu0 0.0
  %624 = vmatpush.msra.mxu0 0.0
  %625 = vmatpush.msra.mxu0 0.0
  %626 = vmatpush.msra.mxu0 0.0
  %627 = vmatpush.msra.mxu0 0.0
  %628 = vmatpush.msra.mxu0 0.0
  %629 = vmatpush.msra.mxu0 0.0
  %630 = vmatpush.msra.mxu0 0.0
  %631 = vmatpush.msra.mxu0 0.0
  %632 = vmatpush.msra.mxu0 0.0
  %633 = vmatpush.msra.mxu0 0.0
  %634 = vmatpush.msra.mxu0 0.0
  %635 = vmatpush.msra.mxu0 %v483
  %636 = vmatpush.msra.mxu0 %v475
  %637 = vmatmul.f32.gmra.mxu0 %v501
  %v638 = vpop.f32.mrf.mxu0
  %v639 = vadd.f32 %v493, %v638
  %640 = vmatmul.f32.gmra.mxu0 %v504
  %v641 = vpop.f32.mrf.mxu0
  %v642 = vadd.f32 %v498, %v641
  %643 = vdwg.mxu0
  %644 = vmatpush.msra.mxu0 0.0
  %645 = vmatpush.msra.mxu0 0.0
  %646 = vmatpush.msra.mxu0 0.0
  %647 = vmatpush.msra.mxu0 0.0
  %648 = vmatpush.msra.mxu0 0.0
  %649 = vmatpush.msra.mxu0 0.0
  %650 = vmatpush.msra.mxu0 0.0
  %651 = vmatpush.msra.mxu0 0.0
  %652 = vmatpush.msra.mxu0 0.0
  %653 = vmatpush.msra.mxu0 0.0
  %654 = vmatpush.msra.mxu0 0.0
  %655 = vmatpush.msra.mxu0 0.0
  %656 = vmatpush.msra.mxu0 0.0
  %657 = vmatpush.msra.mxu0 0.0
  %658 = vmatpush.msra.mxu0 %v484
  %659 = vmatpush.msra.mxu0 %v476
  %660 = vmatmul.f32.gmra.mxu0 %v501
  %v661 = vpop.f32.mrf.mxu0
  %v662 = vadd.f32 %v493, %v661
  %663 = vmatmul.f32.gmra.mxu0 %v504
  %v664 = vpop.f32.mrf.mxu0
  %v665 = vadd.f32 %v498, %v664
  %666 = vdwg.mxu0
  %667 = vmatpush.msra.mxu0 0.0
  %668 = vmatpush.msra.mxu0 0.0
  %669 = vmatpush.msra.mxu0 0.0
  %670 = vmatpush.msra.mxu0 0.0
  %671 = vmatpush.msra.mxu0 0.0
  %672 = vmatpush.msra.mxu0 0.0
  %673 = vmatpush.msra.mxu0 0.0
  %674 = vmatpush.msra.mxu0 0.0
  %675 = vmatpush.msra.mxu0 0.0
  %676 = vmatpush.msra.mxu0 0.0
  %677 = vmatpush.msra.mxu0 0.0
  %678 = vmatpush.msra.mxu0 0.0
  %679 = vmatpush.msra.mxu0 0.0
  %680 = vmatpush.msra.mxu0 0.0
  %681 = vmatpush.msra.mxu0 %v485
  %682 = vmatpush.msra.mxu0 %v477
  %683 = vmatmul.f32.gmra.mxu0 %v501
  %v684 = vpop.f32.mrf.mxu0
  %v685 = vadd.f32 %v493, %v684
  %686 = vmatmul.f32.gmra.mxu0 %v504
  %v687 = vpop.f32.mrf.mxu0
  %v688 = vadd.f32 %v498, %v687
  %689 = vdwg.mxu0
  %v690 = vmax.f32 %v524, 0.0
  %v691 = vmax.f32 %v547, 0.0
  %v692 = vmax.f32 %v570, 0.0
  %v693 = vmax.f32 %v593, 0.0
  %v694 = vmax.f32 %v616, 0.0
  %v695 = vmax.f32 %v639, 0.0
  %v696 = vmax.f32 %v662, 0.0
  %v697 = vmax.f32 %v685, 0.0
  %v698 = vmax.f32 %v527, 0.0
  %v699 = vmax.f32 %v550, 0.0
  %v700 = vmax.f32 %v573, 0.0
  %v701 = vmax.f32 %v596, 0.0
  %v702 = vmax.f32 %v619, 0.0
  %v703 = vmax.f32 %v642, 0.0
  %v704 = vmax.f32 %v665, 0.0
  %v705 = vmax.f32 %v688, 0.0
  %v706 = vld [vmem:[%s7] sm:$0x3]
  %v707 = vld [vmem:[%s8] sm:$0x3]
  %709 = vset.pattern.permute.xlu0 0
  %710 = vperm.xlu0 %709, %v707
  %v711 = vpop.permute.xlu0 %710
  %v714 = vsel %vm279, %v706, 0
  %716 = vmatpush.msra.mxu0 0.0
  %717 = vmatpush.msra.mxu0 0.0
  %718 = vmatpush.msra.mxu0 0.0
  %719 = vmatpush.msra.mxu0 0.0
  %720 = vmatpush.msra.mxu0 0.0
  %721 = vmatpush.msra.mxu0 0.0
  %722 = vmatpush.msra.mxu0 0.0
  %723 = vmatpush.msra.mxu0 0.0
  %724 = vmatpush.msra.mxu0 0.0
  %725 = vmatpush.msra.mxu0 0.0
  %726 = vmatpush.msra.mxu0 0.0
  %727 = vmatpush.msra.mxu0 0.0
  %728 = vmatpush.msra.mxu0 0.0
  %729 = vmatpush.msra.mxu0 0.0
  %730 = vmatpush.msra.mxu0 %v698
  %731 = vmatpush.msra.mxu0 %v690
  %732 = vmatmul.f32.gmra.mxu0 %v714
  %v733 = vpop.f32.mrf.mxu0
  %v734 = vadd.f32 %v711, %v733
  %735 = vdwg.mxu0
  %736 = vmatpush.msra.mxu0 0.0
  %737 = vmatpush.msra.mxu0 0.0
  %738 = vmatpush.msra.mxu0 0.0
  %739 = vmatpush.msra.mxu0 0.0
  %740 = vmatpush.msra.mxu0 0.0
  %741 = vmatpush.msra.mxu0 0.0
  %742 = vmatpush.msra.mxu0 0.0
  %743 = vmatpush.msra.mxu0 0.0
  %744 = vmatpush.msra.mxu0 0.0
  %745 = vmatpush.msra.mxu0 0.0
  %746 = vmatpush.msra.mxu0 0.0
  %747 = vmatpush.msra.mxu0 0.0
  %748 = vmatpush.msra.mxu0 0.0
  %749 = vmatpush.msra.mxu0 0.0
  %750 = vmatpush.msra.mxu0 %v699
  %751 = vmatpush.msra.mxu0 %v691
  %752 = vmatmul.f32.gmra.mxu0 %v714
  %v753 = vpop.f32.mrf.mxu0
  %v754 = vadd.f32 %v711, %v753
  %755 = vdwg.mxu0
  %756 = vmatpush.msra.mxu0 0.0
  %757 = vmatpush.msra.mxu0 0.0
  %758 = vmatpush.msra.mxu0 0.0
  %759 = vmatpush.msra.mxu0 0.0
  %760 = vmatpush.msra.mxu0 0.0
  %761 = vmatpush.msra.mxu0 0.0
  %762 = vmatpush.msra.mxu0 0.0
  %763 = vmatpush.msra.mxu0 0.0
  %764 = vmatpush.msra.mxu0 0.0
  %765 = vmatpush.msra.mxu0 0.0
  %766 = vmatpush.msra.mxu0 0.0
  %767 = vmatpush.msra.mxu0 0.0
  %768 = vmatpush.msra.mxu0 0.0
  %769 = vmatpush.msra.mxu0 0.0
  %770 = vmatpush.msra.mxu0 %v700
  %771 = vmatpush.msra.mxu0 %v692
  %772 = vmatmul.f32.gmra.mxu0 %v714
  %v773 = vpop.f32.mrf.mxu0
  %v774 = vadd.f32 %v711, %v773
  %775 = vdwg.mxu0
  %776 = vmatpush.msra.mxu0 0.0
  %777 = vmatpush.msra.mxu0 0.0
  %778 = vmatpush.msra.mxu0 0.0
  %779 = vmatpush.msra.mxu0 0.0
  %780 = vmatpush.msra.mxu0 0.0
  %781 = vmatpush.msra.mxu0 0.0
  %782 = vmatpush.msra.mxu0 0.0
  %783 = vmatpush.msra.mxu0 0.0
  %784 = vmatpush.msra.mxu0 0.0
  %785 = vmatpush.msra.mxu0 0.0
  %786 = vmatpush.msra.mxu0 0.0
  %787 = vmatpush.msra.mxu0 0.0
  %788 = vmatpush.msra.mxu0 0.0
  %789 = vmatpush.msra.mxu0 0.0
  %790 = vmatpush.msra.mxu0 %v701
  %791 = vmatpush.msra.mxu0 %v693
  %792 = vmatmul.f32.gmra.mxu0 %v714
  %v793 = vpop.f32.mrf.mxu0
  %v794 = vadd.f32 %v711, %v793
  %795 = vdwg.mxu0
  %796 = vmatpush.msra.mxu0 0.0
  %797 = vmatpush.msra.mxu0 0.0
  %798 = vmatpush.msra.mxu0 0.0
  %799 = vmatpush.msra.mxu0 0.0
  %800 = vmatpush.msra.mxu0 0.0
  %801 = vmatpush.msra.mxu0 0.0
  %802 = vmatpush.msra.mxu0 0.0
  %803 = vmatpush.msra.mxu0 0.0
  %804 = vmatpush.msra.mxu0 0.0
  %805 = vmatpush.msra.mxu0 0.0
  %806 = vmatpush.msra.mxu0 0.0
  %807 = vmatpush.msra.mxu0 0.0
  %808 = vmatpush.msra.mxu0 0.0
  %809 = vmatpush.msra.mxu0 0.0
  %810 = vmatpush.msra.mxu0 %v702
  %811 = vmatpush.msra.mxu0 %v694
  %812 = vmatmul.f32.gmra.mxu0 %v714
  %v813 = vpop.f32.mrf.mxu0
  %v814 = vadd.f32 %v711, %v813
  %815 = vdwg.mxu0
  %816 = vmatpush.msra.mxu0 0.0
  %817 = vmatpush.msra.mxu0 0.0
  %818 = vmatpush.msra.mxu0 0.0
  %819 = vmatpush.msra.mxu0 0.0
  %820 = vmatpush.msra.mxu0 0.0
  %821 = vmatpush.msra.mxu0 0.0
  %822 = vmatpush.msra.mxu0 0.0
  %823 = vmatpush.msra.mxu0 0.0
  %824 = vmatpush.msra.mxu0 0.0
  %825 = vmatpush.msra.mxu0 0.0
  %826 = vmatpush.msra.mxu0 0.0
  %827 = vmatpush.msra.mxu0 0.0
  %828 = vmatpush.msra.mxu0 0.0
  %829 = vmatpush.msra.mxu0 0.0
  %830 = vmatpush.msra.mxu0 %v703
  %831 = vmatpush.msra.mxu0 %v695
  %832 = vmatmul.f32.gmra.mxu0 %v714
  %v833 = vpop.f32.mrf.mxu0
  %v834 = vadd.f32 %v711, %v833
  %835 = vdwg.mxu0
  %836 = vmatpush.msra.mxu0 0.0
  %837 = vmatpush.msra.mxu0 0.0
  %838 = vmatpush.msra.mxu0 0.0
  %839 = vmatpush.msra.mxu0 0.0
  %840 = vmatpush.msra.mxu0 0.0
  %841 = vmatpush.msra.mxu0 0.0
  %842 = vmatpush.msra.mxu0 0.0
  %843 = vmatpush.msra.mxu0 0.0
  %844 = vmatpush.msra.mxu0 0.0
  %845 = vmatpush.msra.mxu0 0.0
  %846 = vmatpush.msra.mxu0 0.0
  %847 = vmatpush.msra.mxu0 0.0
  %848 = vmatpush.msra.mxu0 0.0
  %849 = vmatpush.msra.mxu0 0.0
  %850 = vmatpush.msra.mxu0 %v704
  %851 = vmatpush.msra.mxu0 %v696
  %852 = vmatmul.f32.gmra.mxu0 %v714
  %v853 = vpop.f32.mrf.mxu0
  %v854 = vadd.f32 %v711, %v853
  %855 = vdwg.mxu0
  %856 = vmatpush.msra.mxu0 0.0
  %857 = vmatpush.msra.mxu0 0.0
  %858 = vmatpush.msra.mxu0 0.0
  %859 = vmatpush.msra.mxu0 0.0
  %860 = vmatpush.msra.mxu0 0.0
  %861 = vmatpush.msra.mxu0 0.0
  %862 = vmatpush.msra.mxu0 0.0
  %863 = vmatpush.msra.mxu0 0.0
  %864 = vmatpush.msra.mxu0 0.0
  %865 = vmatpush.msra.mxu0 0.0
  %866 = vmatpush.msra.mxu0 0.0
  %867 = vmatpush.msra.mxu0 0.0
  %868 = vmatpush.msra.mxu0 0.0
  %869 = vmatpush.msra.mxu0 0.0
  %870 = vmatpush.msra.mxu0 %v705
  %871 = vmatpush.msra.mxu0 %v697
  %872 = vmatmul.f32.gmra.mxu0 %v714
  %v873 = vpop.f32.mrf.mxu0
  %v874 = vadd.f32 %v711, %v873
  %875 = vdwg.mxu0
  %v884 = vrot.slane %v754, 6
  %v885 = vrot.slane %v774, 4
  %v886 = vrot.slane %v794, 2
  %v887 = vrot.slane %v834, 6
  %v888 = vrot.slane %v854, 4
  %v889 = vrot.slane %v874, 2
  %vm890 = vcmask 1041408
  %v891 = vsel %vm890, %v734, %v884
  %vm892 = vcmask 1045508
  %v893 = vsel %vm892, %v885, %v886
  %vm894 = vcmask 1043456
  %v895 = vsel %vm894, %v891, %v893
  %v896 = vsel %vm890, %v814, %v887
  %v897 = vsel %vm892, %v888, %v889
  %v898 = vsel %vm894, %v896, %v897
  %901 = vst [vmem:[%s9] sm:$0xff] %v895
  %902 = vst [vmem:[%s9 + $0x8] sm:$0xff] %v898
  // Predicated region
  $region38: #{conductor_net.1} parent=0 // pred_check
    _
  $region39: #{conductor_net.1} parent=0 // pred_check_branch
    %904 = sbr.rel (0) target = $region41
  $region40: #{conductor_net.1} parent=0 // pred_region
    _
  $region41: #{conductor_net.1} parent=0 // pred_fallthru
    _
  // Predicated region
  $region42: #{conductor_net.1} parent=0 // pred_check
    _
  $region43: #{conductor_net.1} parent=0 // pred_check_branch
    %906 = sbr.rel (0) target = $region45
  $region44: #{conductor_net.1} parent=0 // pred_region
    _
  $region45: #{conductor_net.1} parent=0 // pred_fallthru
    _

</llo_original>
